<compile_context>
chip_gen: v6e
topology: v6e:2x2x1
jax: 0.10.0
libtpu: 0.0.40
codegen_flags: <defaults>
</compile_context>

<pallas_src>
import jax
import jax.numpy as jnp
import numpy as np
from jax.experimental import pallas as pl
from jax.experimental.pallas import tpu as pltpu

_LANE = 128
_MAX_LANE_WIDTH = 4096                 # cap on the lane-dense last dim
_PER_BLOCK_BUDGET = 8 * 1024 * 1024    # bytes/block: v7x-safe, still large for v5e/v6e
_VMEM_LIMIT = 48 * 1024 * 1024         # > v5e's 16 MiB scoped default, < v7x 64 MiB


def _copy_kernel(x_ref, o_ref):
    # Whole-tile pass-through (pure vld/vst, no compute).
    o_ref[...] = x_ref[...]


def _lane_dense_2d(total, sublane):
    """Factor `total` elements into (rows, cols) with cols a multiple of 128."""
    if total % _LANE != 0:
        return None
    q = total // _LANE
    divisors = [m for m in range(1, min(q, _MAX_LANE_WIDTH // _LANE) + 1) if q % m == 0]
    # Widest lane-dense cols that still leaves at least one sublane group of
    # rows; otherwise simply the widest divisor.
    good = [m for m in divisors if total // (_LANE * m) >= sublane]
    m = max(good) if good else max(divisors)
    cols = _LANE * m
    return total // cols, cols


def custom_unet_forward(x):
    """Forward pass of CustomUNET (stub -> identity).

    Args:
      x: (N, C, H, W) array (NCHW, matching PyTorch conv layout).
    Returns:
      (N, C, H, W) array identical to x.
    """
    n, c, h, w = x.shape
    dtype = x.dtype
    itemsize = jnp.dtype(dtype).itemsize
    # Sublane tile: 8 rows for 32-bit, 16 for 16-bit, 32 for 8-bit dtypes.
    sublane = {4: 8, 2: 16, 1: 32}.get(itemsize, 8)

    total = n * c * h * w
    view = _lane_dense_2d(total, sublane)
    if view is None:
        # Element count not a multiple of 128: keep (N*C, H*W); ragged lane
        # edges are masked by Pallas (still tiled, never a full-array block).
        view = (n * c, h * w)
    rows, cols = view
    x2d = x.reshape(rows, cols)

    # ---- column tile: multiple of 128, or the full width ----
    if cols * itemsize * sublane <= _PER_BLOCK_BUDGET:
        tc = cols
    else:
        tc = max(_LANE, (_PER_BLOCK_BUDGET // (itemsize * sublane)) // _LANE * _LANE)
        tc = min(tc, max(_LANE, (cols // _LANE) * _LANE))

    # ---- row tile: multiple of the sublane tile, or the full height ----
    if rows <= sublane:
        tr = rows
    else:
        tr = (_PER_BLOCK_BUDGET // (tc * itemsize)) // sublane * sublane
        tr = max(sublane, min(tr, pl.cdiv(rows, sublane) * sublane))
        # Keep >= 2 grid steps where possible so both v7x TensorCores get work.
        if pl.cdiv(rows, tr) * pl.cdiv(cols, tc) < 2:
            tr = max(sublane, pl.cdiv(rows, 2 * sublane) * sublane)

    grid = (pl.cdiv(rows, tr), pl.cdiv(cols, tc))

    out2d = pl.pallas_call(
        _copy_kernel,
        out_shape=jax.ShapeDtypeStruct((rows, cols), dtype),
        grid=grid,
        in_specs=[pl.BlockSpec((tr, tc), lambda i, j: (i, j))],
        out_specs=pl.BlockSpec((tr, tc), lambda i, j: (i, j)),
        input_output_aliases={0: 0},  # realized via donate_argnums at the jit boundary
        compiler_params=pltpu.CompilerParams(
            dimension_semantics=("parallel", "parallel"),
            vmem_limit_bytes=_VMEM_LIMIT,
        ),
        cost_estimate=pl.CostEstimate(
            flops=0,
            transcendentals=0,
            bytes_accessed=2 * total * itemsize,
        ),
    )(x2d)

    return out2d.reshape(n, c, h, w)


class CustomUNET:
    """JAX mirror of the (stub) PyTorch CustomUNET module."""

    def __init__(self, num_filters, num_colors, in_channels=1, out_channels=3):
        # Reference __init__ only builds empty ModuleLists -> no parameters.
        self.num_filters = num_filters
        self.num_colors = num_colors
        self.in_channels = in_channels
        self.out_channels = out_channels
        self.ups = []    # nn.ModuleList()  (empty in the source)
        self.downs = []  # nn.ModuleList()  (empty in the source)

    def __call__(self, x):
        return custom_unet_forward(x)


if __name__ == "__main__":
    key = jax.random.PRNGKey(0)
    # Small shapes consistent with the module: batch=2, channels=4, 16x16.
    x = jax.random.normal(key, (2, 4, 16, 16), dtype=jnp.float32)
    # Snapshot on host BEFORE donation invalidates x's device buffer.
    x_host = np.asarray(jax.device_get(x))

    model = CustomUNET(num_filters=4, num_colors=3, in_channels=4, out_channels=3)
    # Donate the argument so input_output_aliases={0:0} is a true in-place
    # alias (no defensive copy, no second full-size HBM allocation).
    fwd = jax.jit(model.__call__, donate_argnums=0)
    y = fwd(x)
    jax.block_until_ready(y)

    # Sanity: the stub forward applies no transformation.
    assert y.shape == x_host.shape and y.dtype == x_host.dtype
    assert np.allclose(np.asarray(y), x_host)

    print("KERNEL_OK")
</pallas_src>

<mosaic_0001>
module attributes {stable_mosaic.version = 11 : i64} {
  func.func @_copy_kernel(%arg0: i32, %arg1: i32, %arg2: memref<8x256xf32, #tpu.memory_space<vmem>>, %arg3: memref<8x256xf32, #tpu.memory_space<vmem>>) attributes {dimension_semantics = [#tpu.dimension_semantics<parallel>, #tpu.dimension_semantics<parallel>], iteration_bounds = array<i64: 1, 1>, scalar_prefetch = 0 : i64, scratch_operands = 0 : i64, tpu.core_type = #tpu.core_type<tc>, window_params = [{transform_indices = @transform_0, window_bounds = array<i64: 8, 256>}, {transform_indices = @transform_1, window_bounds = array<i64: 8, 256>}]} {
    %c0 = arith.constant 0 : index
    %c0_0 = arith.constant 0 : index
    %0 = vector.load %arg2[%c0, %c0_0] : memref<8x256xf32, #tpu.memory_space<vmem>>, vector<8x256xf32>
    %c0_1 = arith.constant 0 : index
    %c0_2 = arith.constant 0 : index
    %1 = vector.load %arg3[%c0_1, %c0_2] : memref<8x256xf32, #tpu.memory_space<vmem>>, vector<8x256xf32>
    tpu.vector_store %arg3[%c0_1, %c0_2], %0 {strides = array<i32>} : memref<8x256xf32, #tpu.memory_space<vmem>>, vector<8x256xf32>,
    return
  }
  func.func @transform_0(%arg0: i32, %arg1: i32) -> (i32, i32) {
    %c0_i32 = arith.constant 0 : i32
    return %arg0, %arg1 : i32, i32
  }
  func.func @transform_1(%arg0: i32, %arg1: i32) -> (i32, i32) {
    %c0_i32 = arith.constant 0 : i32
    return %arg0, %arg1 : i32, i32
  }
}

</mosaic_0001>

<llo_original>
// kernel: a_call__.1
$region0: #{a_call__.1}
  #allocation0 [shape = 'u32[]', space=smem, size = 0x4, offset = 0x4, fixed_abs, tag = 'smem constant byte address 0x4 - core index']
  #allocation1 [shape = 'u32[144,128]{1,0:T(1,128)}', space=vmem, size = 0x12000, scoped, tag = 'internal scratch']
  %s0 = inlined_call_operand.vmem [shape: f32[8,256], index: 0, kind: input, shape index: {}, may-alias: {0,1}]
  %s1 = inlined_call_operand.vmem [shape: f32[8,256], index: 1, kind: output, shape index: {}, may-alias: {0,1}]
  %s2 = sld [smem:[#allocation0]]
  $region14: #{a_call__.1} parent=0
    _
  %s4 = ssub.s32 1, %s2
  %s5 = scalar_select 0, %s4, %s2
  // Predicated region
  $region2: #{a_call__.1} parent=0 // pred_check
    _
  $region3: #{a_call__.1} parent=0 // pred_check_branch
    %7 = sbr.rel (0) target = $region5
  $region4: #{a_call__.1} parent=0 // pred_region
    _
  $region5: #{a_call__.1} parent=0 // pred_fallthru
    _
  %v8 = vld [vmem:[%s0] sm:$0xff]
  %v9 = vld [vmem:[%s0 + $0x8] sm:$0xff]
  %10 = vst [vmem:[%s1] sm:$0xff] %v8
  %11 = vst [vmem:[%s1 + $0x8] sm:$0xff] %v9
  // Predicated region
  $region6: #{a_call__.1} parent=0 // pred_check
    _
  $region7: #{a_call__.1} parent=0 // pred_check_branch
    %13 = sbr.rel (0) target = $region9
  $region8: #{a_call__.1} parent=0 // pred_region
    _
  $region9: #{a_call__.1} parent=0 // pred_fallthru
    _
  // Predicated region
  $region10: #{a_call__.1} parent=0 // pred_check
    _
  $region11: #{a_call__.1} parent=0 // pred_check_branch
    %15 = sbr.rel (0) target = $region13
  $region12: #{a_call__.1} parent=0 // pred_region
    _
  $region13: #{a_call__.1} parent=0 // pred_fallthru
    _

</llo_original>
